<compile_context>
chip_gen: v7x
topology: tpu7x:2x2x1
jax: 0.10.0
libtpu: 0.0.40
codegen_flags: <defaults>
</compile_context>

<pallas_src>
import functools

import jax
import jax.numpy as jnp
from jax import lax
from jax.experimental import pallas as pl
from jax.experimental.pallas import tpu as pltpu

KSIZE = 3  # kernel_size of the PyTorch module (padding = KSIZE // 2 = 1)


def _resblock_kernel(x_ref, w1_ref, b1_ref, w2_ref, b2_ref, o_ref, *, img_rows):
    """Residual block on one batch-block, in flattened (rows, W*C) layout.

    x_ref  : (M, WC)       input rows (M = block_n * H), lane-dense
    w1_ref : (WC, 3*WC)    conv1 weights with horizontal taps/padding folded in
    b1_ref : (1, WC)       conv1 bias tiled over W
    w2_ref : (WC, 3*WC)    conv2 weights
    b2_ref : (1, WC)       conv2 bias
    o_ref  : (M, WC)       output rows
    """
    x = x_ref[...].astype(jnp.float32)
    M, WC = x.shape

    # 0/1 row-shift matrices implementing the vertical +-1 taps with zero
    # padding at every image boundary (rows come in groups of `img_rows`).
    ri = lax.broadcasted_iota(jnp.int32, (M, M), 0)
    ci = lax.broadcasted_iota(jnp.int32, (M, M), 1)
    s_up = ((ci == ri - 1) & (ri % img_rows != 0)).astype(jnp.float32)
    s_dn = ((ci == ri + 1) & (ri % img_rows != img_rows - 1)).astype(jnp.float32)

    def conv3x3(v, w_ref, b_ref):
        # One fused MXU matmul applies, for each of the 3 vertical taps, all
        # 3 horizontal taps + horizontal SAME padding.
        u = jnp.dot(v, w_ref[...].astype(jnp.float32),
                    preferred_element_type=jnp.float32)          # (M, 3*WC)
        u0 = u[:, 0 * WC:1 * WC]   # ky = 0 tap: needs input row i-1
        u1 = u[:, 1 * WC:2 * WC]   # ky = 1 tap: same row
        u2 = u[:, 2 * WC:3 * WC]   # ky = 2 tap: needs input row i+1
        acc = (jnp.dot(s_up, u0, preferred_element_type=jnp.float32)
               + u1
               + jnp.dot(s_dn, u2, preferred_element_type=jnp.float32))
        return acc + b_ref[...].astype(jnp.float32)

    h = jnp.maximum(conv3x3(x, w1_ref, b1_ref), 0.0)   # conv1 + bias + ReLU
    out = conv3x3(h, w2_ref, b2_ref) + x               # conv2 + bias + residual
    o_ref[...] = out.astype(o_ref.dtype)


def _fold_conv_weights(w_hwio, width):
    """HWIO (KH, KW, Cin, Cout) -> (W*Cin, KH*W*Cout) block-banded matrix.

    Wcat[w1*Cin + ci, ky*W*Cout + w2*Cout + co] = w[ky, kx, ci, co]
        with kx = w1 - w2 + KW//2 when 0 <= kx < KW, else 0.
    Multiplying a flattened row (W*Cin,) by Wcat applies, per vertical tap ky,
    all horizontal taps and the horizontal SAME zero padding at once.
    """
    kh, kw, cin, cout = w_hwio.shape
    kx = jnp.arange(kw)[:, None, None]
    w1 = jnp.arange(width)[None, :, None]
    w2 = jnp.arange(width)[None, None, :]
    sel = (w1 == w2 + kx - (kw // 2)).astype(w_hwio.dtype)       # (KW, W, W)
    m = jnp.einsum('ykio,kab->aiybo', w_hwio, sel)               # (W,Cin,KH,W,Cout)
    return m.reshape(width * cin, kh * width * cout)


@functools.partial(jax.jit, static_argnames=('block_n',))
def resblock_forward(x_nhwc, w1, b1, w2, b2, block_n=1):
    """x_nhwc: (N, H, W, C).  w*: HWIO (3,3,C,C).  b*: (C,).  Returns NHWC."""
    N, H, W, C = x_nhwc.shape
    WC = W * C
    assert N % block_n == 0
    M = block_n * H                      # rows per grid step

    # Free reshape (NHWC is row-major contiguous): (N, H, W, C) -> (N*H, W*C).
    x2d = x_nhwc.reshape(N * H, WC)
    wcat1 = _fold_conv_weights(w1, W).astype(jnp.float32)        # (WC, 3*WC)
    wcat2 = _fold_conv_weights(w2, W).astype(jnp.float32)
    b1f = jnp.tile(b1.reshape(1, C), (1, W)).astype(jnp.float32)  # (1, WC)
    b2f = jnp.tile(b2.reshape(1, C), (1, W)).astype(jnp.float32)

    grid = (N // block_n,)
    kernel = functools.partial(_resblock_kernel, img_rows=H)

    flops_per_conv = 2 * M * WC * (KSIZE * WC) + 2 * (2 * M * M * WC)
    cost = pl.CostEstimate(
        flops=grid[0] * 2 * flops_per_conv,
        transcendentals=0,
        bytes_accessed=(2 * x2d.size * x2d.dtype.itemsize
                        + (wcat1.size + wcat2.size + b1f.size + b2f.size) * 4),
    )

    out2d = pl.pallas_call(
        kernel,
        out_shape=jax.ShapeDtypeStruct((N * H, WC), x_nhwc.dtype),
        grid_spec=pltpu.PrefetchScalarGridSpec(
            num_scalar_prefetch=0,
            grid=grid,
            in_specs=[
                pl.BlockSpec((M, WC), lambda g: (g, 0)),            # x rows
                pl.BlockSpec((WC, KSIZE * WC), lambda g: (0, 0)),   # wcat1
                pl.BlockSpec((1, WC), lambda g: (0, 0)),            # b1
                pl.BlockSpec((WC, KSIZE * WC), lambda g: (0, 0)),   # wcat2
                pl.BlockSpec((1, WC), lambda g: (0, 0)),            # b2
            ],
            out_specs=pl.BlockSpec((M, WC), lambda g: (g, 0)),
        ),
        compiler_params=pltpu.CompilerParams(
            dimension_semantics=("parallel",)),
        cost_estimate=cost,
    )(x2d, wcat1, b1f, wcat2, b2f)

    return out2d.reshape(N, H, W, C)


def resblock_reference(x_nhwc, w1, b1, w2, b2):
    """Pure-JAX reference (same semantics as the PyTorch module)."""
    dn = ('NHWC', 'HWIO', 'NHWC')
    h = lax.conv_general_dilated(x_nhwc, w1, (1, 1), 'SAME',
                                 dimension_numbers=dn) + b1
    h = jnp.maximum(h, 0.0)
    o = lax.conv_general_dilated(h, w2, (1, 1), 'SAME',
                                 dimension_numbers=dn) + b2
    return o + x_nhwc


if __name__ == "__main__":
    # Small shapes consistent with the module: batch=2, nFeat=8, spatial=16x16.
    N, C, H, W = 2, 8, 16, 16   # W * C = 128 -> fully lane-dense blocks

    key = jax.random.PRNGKey(0)
    kx, kw1, kb1, kw2, kb2 = jax.random.split(key, 5)

    # PyTorch input is NCHW (2, 8, 16, 16); convert to the kernel's NHWC layout.
    x_nchw = jax.random.normal(kx, (N, C, H, W), jnp.float32)
    x_nhwc = jnp.transpose(x_nchw, (0, 2, 3, 1))

    # Deterministic synthetic parameters (conv weights in HWIO layout).
    w1 = jax.random.normal(kw1, (KSIZE, KSIZE, C, C), jnp.float32) * 0.1
    b1 = jax.random.normal(kb1, (C,), jnp.float32) * 0.1
    w2 = jax.random.normal(kw2, (KSIZE, KSIZE, C, C), jnp.float32) * 0.1
    b2 = jax.random.normal(kb2, (C,), jnp.float32) * 0.1

    out = resblock_forward(x_nhwc, w1, b1, w2, b2)
    out = jax.block_until_ready(out)

    ref = resblock_reference(x_nhwc, w1, b1, w2, b2)
    assert out.shape == (N, H, W, C)
    assert jnp.allclose(out, ref, atol=1e-4, rtol=1e-4), "mismatch vs reference"

    print("KERNEL_OK")
</pallas_src>

<mosaic_0001>
module attributes {stable_mosaic.version = 11 : i64} {
  func.func @_resblock_kernel(%arg0: i32, %arg1: memref<16x128xf32, #tpu.memory_space<vmem>>, %arg2: memref<128x384xf32, #tpu.memory_space<vmem>>, %arg3: memref<1x128xf32, #tpu.memory_space<vmem>>, %arg4: memref<128x384xf32, #tpu.memory_space<vmem>>, %arg5: memref<1x128xf32, #tpu.memory_space<vmem>>, %arg6: memref<16x128xf32, #tpu.memory_space<vmem>>) attributes {dimension_semantics = [#tpu.dimension_semantics<parallel>], iteration_bounds = array<i64: 2>, scalar_prefetch = 0 : i64, scratch_operands = 0 : i64, tpu.core_type = #tpu.core_type<tc>, window_params = [{transform_indices = @transform_0, window_bounds = array<i64: 16, 128>}, {pipeline_mode = #tpu.pipeline_mode<synchronous>, transform_indices = @transform_1, window_bounds = array<i64: 128, 384>}, {pipeline_mode = #tpu.pipeline_mode<synchronous>, transform_indices = @transform_2, window_bounds = array<i64: 1, 128>}, {pipeline_mode = #tpu.pipeline_mode<synchronous>, transform_indices = @transform_3, window_bounds = array<i64: 128, 384>}, {pipeline_mode = #tpu.pipeline_mode<synchronous>, transform_indices = @transform_4, window_bounds = array<i64: 1, 128>}, {transform_indices = @transform_5, window_bounds = array<i64: 16, 128>}]} {
    %c0 = arith.constant 0 : index
    %c0_0 = arith.constant 0 : index
    %0 = vector.load %arg1[%c0, %c0_0] : memref<16x128xf32, #tpu.memory_space<vmem>>, vector<16x128xf32>
    %1 = tpu.iota {dimensions = array<i32: 0>} : vector<16x16xi32>
    %2 = tpu.iota {dimensions = array<i32: 1>} : vector<16x16xi32>
    %c1_i32 = arith.constant 1 : i32
    %3 = vector.broadcast %c1_i32 : i32 to vector<16x16xi32>
    %4 = arith.subi %1, %3 : vector<16x16xi32>
    %5 = arith.cmpi eq, %2, %4 : vector<16x16xi32>
    %c16_i32 = arith.constant 16 : i32
    %c0_i32 = arith.constant 0 : i32
    %6 = arith.cmpi eq, %c16_i32, %c0_i32 : i32
    %c1_i32_1 = arith.constant 1 : i32
    %7 = arith.select %6, %c1_i32_1, %c16_i32 : i32
    %8 = vector.broadcast %7 : i32 to vector<16x16xi32>
    %9 = arith.remsi %1, %8 : vector<16x16xi32>
    %c0_i32_2 = arith.constant 0 : i32
    %10 = vector.broadcast %c0_i32_2 : i32 to vector<16x16xi32>
    %11 = arith.cmpi ne, %9, %10 : vector<16x16xi32>
    %c0_i32_3 = arith.constant 0 : i32
    %12 = vector.broadcast %c0_i32_3 : i32 to vector<16x16xi32>
    %13 = arith.cmpi slt, %9, %12 : vector<16x16xi32>
    %c0_i32_4 = arith.constant 0 : i32
    %14 = arith.cmpi slt, %7, %c0_i32_4 : i32
    %15 = vector.broadcast %14 : i1 to vector<16x16xi1>
    %16 = vector.broadcast %15 : vector<16x16xi1> to vector<16x16xi1>
    %17 = arith.xori %13, %16 : vector<16x16xi1>
    %18 = arith.andi %17, %11 : vector<16x16xi1>
    %19 = vector.broadcast %7 : i32 to vector<16x16xi32>
    %20 = arith.addi %9, %19 : vector<16x16xi32>
    %21 = arith.select %18, %20, %9 : vector<16x16xi1>, vector<16x16xi32>
    %c0_i32_5 = arith.constant 0 : i32
    %22 = vector.broadcast %c0_i32_5 : i32 to vector<16x16xi32>
    %23 = arith.cmpi ne, %21, %22 : vector<16x16xi32>
    %24 = arith.andi %5, %23 : vector<16x16xi1>
    %25 = arith.extui %24 : vector<16x16xi1> to vector<16x16xi32>
    %26 = arith.sitofp %25 : vector<16x16xi32> to vector<16x16xf32>
    %c1_i32_6 = arith.constant 1 : i32
    %27 = vector.broadcast %c1_i32_6 : i32 to vector<16x16xi32>
    %28 = arith.addi %1, %27 : vector<16x16xi32>
    %29 = arith.cmpi eq, %2, %28 : vector<16x16xi32>
    %c16_i32_7 = arith.constant 16 : i32
    %c0_i32_8 = arith.constant 0 : i32
    %30 = arith.cmpi eq, %c16_i32_7, %c0_i32_8 : i32
    %c1_i32_9 = arith.constant 1 : i32
    %31 = arith.select %30, %c1_i32_9, %c16_i32_7 : i32
    %32 = vector.broadcast %31 : i32 to vector<16x16xi32>
    %33 = arith.remsi %1, %32 : vector<16x16xi32>
    %c0_i32_10 = arith.constant 0 : i32
    %34 = vector.broadcast %c0_i32_10 : i32 to vector<16x16xi32>
    %35 = arith.cmpi ne, %33, %34 : vector<16x16xi32>
    %c0_i32_11 = arith.constant 0 : i32
    %36 = vector.broadcast %c0_i32_11 : i32 to vector<16x16xi32>
    %37 = arith.cmpi slt, %33, %36 : vector<16x16xi32>
    %c0_i32_12 = arith.constant 0 : i32
    %38 = arith.cmpi slt, %31, %c0_i32_12 : i32
    %39 = vector.broadcast %38 : i1 to vector<16x16xi1>
    %40 = vector.broadcast %39 : vector<16x16xi1> to vector<16x16xi1>
    %41 = arith.xori %37, %40 : vector<16x16xi1>
    %42 = arith.andi %41, %35 : vector<16x16xi1>
    %43 = vector.broadcast %31 : i32 to vector<16x16xi32>
    %44 = arith.addi %33, %43 : vector<16x16xi32>
    %45 = arith.select %42, %44, %33 : vector<16x16xi1>, vector<16x16xi32>
    %c15_i32 = arith.constant 15 : i32
    %46 = vector.broadcast %c15_i32 : i32 to vector<16x16xi32>
    %47 = arith.cmpi ne, %45, %46 : vector<16x16xi32>
    %48 = arith.andi %29, %47 : vector<16x16xi1>
    %49 = arith.extui %48 : vector<16x16xi1> to vector<16x16xi32>
    %50 = arith.sitofp %49 : vector<16x16xi32> to vector<16x16xf32>
    %c0_13 = arith.constant 0 : index
    %c0_14 = arith.constant 0 : index
    %51 = vector.load %arg2[%c0_13, %c0_14] : memref<128x384xf32, #tpu.memory_space<vmem>>, vector<128x384xf32>
    %cst = arith.constant dense<0.000000e+00> : vector<16x384xf32>
    %52 = tpu.matmul %0, %51, %cst {dimension_numbers = #tpu.dot_dimension_numbers<[1], [0], [0], [1], [0, 0, 1, 1], [], []>} : vector<16x128xf32>, vector<128x384xf32>, vector<16x384xf32> -> vector<16x384xf32>
    %53 = vector.extract_strided_slice %52 {offsets = [0, 0], sizes = [16, 128], strides = [1, 1]} : vector<16x384xf32> to vector<16x128xf32>
    %54 = vector.extract_strided_slice %52 {offsets = [0, 128], sizes = [16, 128], strides = [1, 1]} : vector<16x384xf32> to vector<16x128xf32>
    %55 = vector.extract_strided_slice %52 {offsets = [0, 256], sizes = [16, 128], strides = [1, 1]} : vector<16x384xf32> to vector<16x128xf32>
    %cst_15 = arith.constant dense<0.000000e+00> : vector<16x128xf32>
    %56 = tpu.matmul %26, %53, %cst_15 {dimension_numbers = #tpu.dot_dimension_numbers<[1], [0], [0], [1], [0, 0, 1, 1], [], []>} : vector<16x16xf32>, vector<16x128xf32>, vector<16x128xf32> -> vector<16x128xf32>
    %57 = arith.addf %56, %54 : vector<16x128xf32>
    %cst_16 = arith.constant dense<0.000000e+00> : vector<16x128xf32>
    %58 = tpu.matmul %50, %55, %cst_16 {dimension_numbers = #tpu.dot_dimension_numbers<[1], [0], [0], [1], [0, 0, 1, 1], [], []>} : vector<16x16xf32>, vector<16x128xf32>, vector<16x128xf32> -> vector<16x128xf32>
    %59 = arith.addf %57, %58 : vector<16x128xf32>
    %c0_17 = arith.constant 0 : index
    %c0_18 = arith.constant 0 : index
    %60 = vector.load %arg3[%c0_17, %c0_18] : memref<1x128xf32, #tpu.memory_space<vmem>>, vector<1x128xf32>
    %61 = vector.broadcast %60 : vector<1x128xf32> to vector<16x128xf32>
    %62 = arith.addf %59, %61 : vector<16x128xf32>
    %cst_19 = arith.constant 0.000000e+00 : f32
    %63 = vector.broadcast %cst_19 : f32 to vector<16x128xf32>
    %64 = arith.maximumf %62, %63 : vector<16x128xf32>
    %c0_20 = arith.constant 0 : index
    %c0_21 = arith.constant 0 : index
    %65 = vector.load %arg4[%c0_20, %c0_21] : memref<128x384xf32, #tpu.memory_space<vmem>>, vector<128x384xf32>
    %cst_22 = arith.constant dense<0.000000e+00> : vector<16x384xf32>
    %66 = tpu.matmul %64, %65, %cst_22 {dimension_numbers = #tpu.dot_dimension_numbers<[1], [0], [0], [1], [0, 0, 1, 1], [], []>} : vector<16x128xf32>, vector<128x384xf32>, vector<16x384xf32> -> vector<16x384xf32>
    %67 = vector.extract_strided_slice %66 {offsets = [0, 0], sizes = [16, 128], strides = [1, 1]} : vector<16x384xf32> to vector<16x128xf32>
    %68 = vector.extract_strided_slice %66 {offsets = [0, 128], sizes = [16, 128], strides = [1, 1]} : vector<16x384xf32> to vector<16x128xf32>
    %69 = vector.extract_strided_slice %66 {offsets = [0, 256], sizes = [16, 128], strides = [1, 1]} : vector<16x384xf32> to vector<16x128xf32>
    %cst_23 = arith.constant dense<0.000000e+00> : vector<16x128xf32>
    %70 = tpu.matmul %26, %67, %cst_23 {dimension_numbers = #tpu.dot_dimension_numbers<[1], [0], [0], [1], [0, 0, 1, 1], [], []>} : vector<16x16xf32>, vector<16x128xf32>, vector<16x128xf32> -> vector<16x128xf32>
    %71 = arith.addf %70, %68 : vector<16x128xf32>
    %cst_24 = arith.constant dense<0.000000e+00> : vector<16x128xf32>
    %72 = tpu.matmul %50, %69, %cst_24 {dimension_numbers = #tpu.dot_dimension_numbers<[1], [0], [0], [1], [0, 0, 1, 1], [], []>} : vector<16x16xf32>, vector<16x128xf32>, vector<16x128xf32> -> vector<16x128xf32>
    %73 = arith.addf %71, %72 : vector<16x128xf32>
    %c0_25 = arith.constant 0 : index
    %c0_26 = arith.constant 0 : index
    %74 = vector.load %arg5[%c0_25, %c0_26] : memref<1x128xf32, #tpu.memory_space<vmem>>, vector<1x128xf32>
    %75 = vector.broadcast %74 : vector<1x128xf32> to vector<16x128xf32>
    %76 = arith.addf %73, %75 : vector<16x128xf32>
    %77 = arith.addf %76, %0 : vector<16x128xf32>
    %c0_27 = arith.constant 0 : index
    %c0_28 = arith.constant 0 : index
    %78 = vector.load %arg6[%c0_27, %c0_28] : memref<16x128xf32, #tpu.memory_space<vmem>>, vector<16x128xf32>
    tpu.vector_store %arg6[%c0_27, %c0_28], %77 {strides = array<i32>} : memref<16x128xf32, #tpu.memory_space<vmem>>, vector<16x128xf32>,
    return
  }
  func.func @transform_0(%arg0: i32) -> (i32, i32) {
    %c0_i32 = arith.constant 0 : i32
    %c0_i32_0 = arith.constant 0 : i32
    return %arg0, %c0_i32 : i32, i32
  }
  func.func @transform_1(%arg0: i32) -> (i32, i32) {
    %c0_i32 = arith.constant 0 : i32
    %c0_i32_0 = arith.constant 0 : i32
    %c0_i32_1 = arith.constant 0 : i32
    return %c0_i32, %c0_i32_0 : i32, i32
  }
  func.func @transform_2(%arg0: i32) -> (i32, i32) {
    %c0_i32 = arith.constant 0 : i32
    %c0_i32_0 = arith.constant 0 : i32
    %c0_i32_1 = arith.constant 0 : i32
    return %c0_i32, %c0_i32_0 : i32, i32
  }
  func.func @transform_3(%arg0: i32) -> (i32, i32) {
    %c0_i32 = arith.constant 0 : i32
    %c0_i32_0 = arith.constant 0 : i32
    %c0_i32_1 = arith.constant 0 : i32
    return %c0_i32, %c0_i32_0 : i32, i32
  }
  func.func @transform_4(%arg0: i32) -> (i32, i32) {
    %c0_i32 = arith.constant 0 : i32
    %c0_i32_0 = arith.constant 0 : i32
    %c0_i32_1 = arith.constant 0 : i32
    return %c0_i32, %c0_i32_0 : i32, i32
  }
  func.func @transform_5(%arg0: i32) -> (i32, i32) {
    %c0_i32 = arith.constant 0 : i32
    %c0_i32_0 = arith.constant 0 : i32
    return %arg0, %c0_i32 : i32, i32
  }
}

</mosaic_0001>

<llo_original>
// kernel: resblock_forward.1
$region0: #{resblock_forward.1}
  #allocation0 [shape = 'u32[]', space=smem, size = 0x4, offset = 0x4, fixed_abs, tag = 'smem constant byte address 0x4 - core index']
  #allocation1 [shape = 'u32[144,128]{1,0:T(1,128)}', space=vmem, size = 0x12000, scoped, tag = 'internal scratch']
  %s0 = inlined_call_operand.vmem [shape: f32[32,128], index: 0, kind: input, shape index: {}]
  %s1 = inlined_call_operand.vmem [shape: f32[128,384], index: 1, kind: input, shape index: {}]
  %s2 = inlined_call_operand.vmem [shape: f32[1,128], index: 2, kind: input, shape index: {}]
  %s3 = inlined_call_operand.vmem [shape: f32[128,384], index: 3, kind: input, shape index: {}]
  %s4 = inlined_call_operand.vmem [shape: f32[1,128], index: 4, kind: input, shape index: {}]
  %s5 = inlined_call_operand.vmem [shape: f32[32,128], index: 5, kind: output, shape index: {}]
  %s6 = sld [smem:[#allocation0]]
  $region53: #{resblock_forward.1} parent=0
    _
  %s8 = ssub.s32 1, %s6
  %s9 = scalar_select 0, %s8, %s6
  loop: start=0, step=1, limit=4
  $region2: #{resblock_forward.1} parent=0 // loop_pre_header
    _
  $region3: #{resblock_forward.1} parent=0 // loop_header
    %s11 = sphi 0, %s15
    %p12 = scmp.ge.s32.totalorder %s11, 4
    %s21 = sphi 0, %s23
    %s24 = sphi 0, %s21
    %s25 = sphi 0, %s24
    %s41 = sphi 0, %s25
    %s45 = sphi 0, %s45
    %s47 = sphi 0, %s45
    %s48 = sphi 0, %s47
    %s62 = sphi 0, %s48
    %s66 = sphi 0, %s66
    %s68 = sphi 0, %s66
    %s69 = sphi 0, %s68
    %s83 = sphi 0, %s69
    %s87 = sphi 0, %s87
    %s89 = sphi 0, %s87
    %s90 = sphi 0, %s89
    %s104 = sphi 0, %s90
    %s108 = sphi 0, %s108
    %s110 = sphi 0, %s108
    %s111 = sphi 0, %s110
    %s125 = sphi 0, %s111
    %s131 = sphi 0, %s133
    %s134 = sphi 0, %s131
    %s135 = sphi 0, %s134
    %s151 = sphi 0, %s135
  $region4: #{resblock_forward.1} parent=0 // loop_header_branch
    %14 = sbr.rel (%p12) target = $region8
  $region5: #{resblock_forward.1} parent=0 // loop_body
    %s16 = ssub.s32 %s11, 1
    %s17 = ssub.s32 %s11, 2
    %s18 = sadd.s32 %s11, 1
    %s19 = ssub.s32 %s11, %s18
    %p20 = scmp.eq.s32.totalorder %s19, 0
    %s22 = sadd.s32 %s21, 1
    %s23 = scalar_select %p20, %s21, %s22
    %p26 = pneg %p20
    %p27 = scmp.eq.s32.totalorder %s11, 1
    %p28 = por %p26, %p27
    %p29 = scmp.ne.s32.totalorder %s21, %s24
    %p30 = scmp.eq.s32.totalorder %s11, 0
    %p31 = por %p29, %p30
    %p32 = scmp.ne.s32.totalorder %s21, %s24
    %p33 = scmp.eq.s32.totalorder %s16, 1
    %p34 = por %p32, %p33
    %p35 = scmp.ne.s32.totalorder %s24, %s25
    %p36 = scmp.eq.s32.totalorder %s16, 0
    %p37 = por %p35, %p36
    %p38 = scmp.ne.s32.totalorder %s24, %s25
    %p39 = scmp.eq.s32.totalorder %s17, 1
    %p40 = por %p38, %p39
    %p42 = scmp.ne.s32.totalorder %s25, %s41
    %p43 = scmp.eq.s32.totalorder %s17, 0
    %p44 = por %p42, %p43
    %s46 = sadd.s32 %s45, 1
    %p49 = scmp.eq.s32.totalorder %s11, 1
    %p50 = scmp.ne.s32.totalorder %s45, %s47
    %p51 = scmp.eq.s32.totalorder %s11, 0
    %p52 = por %p50, %p51
    %p53 = scmp.ne.s32.totalorder %s45, %s47
    %p54 = scmp.eq.s32.totalorder %s16, 1
    %p55 = por %p53, %p54
    %p56 = scmp.ne.s32.totalorder %s47, %s48
    %p57 = scmp.eq.s32.totalorder %s16, 0
    %p58 = por %p56, %p57
    %p59 = scmp.ne.s32.totalorder %s47, %s48
    %p60 = scmp.eq.s32.totalorder %s17, 1
    %p61 = por %p59, %p60
    %p63 = scmp.ne.s32.totalorder %s48, %s62
    %p64 = scmp.eq.s32.totalorder %s17, 0
    %p65 = por %p63, %p64
    %s67 = sadd.s32 %s66, 1
    %p70 = scmp.eq.s32.totalorder %s11, 1
    %p71 = scmp.ne.s32.totalorder %s66, %s68
    %p72 = scmp.eq.s32.totalorder %s11, 0
    %p73 = por %p71, %p72
    %p74 = scmp.ne.s32.totalorder %s66, %s68
    %p75 = scmp.eq.s32.totalorder %s16, 1
    %p76 = por %p74, %p75
    %p77 = scmp.ne.s32.totalorder %s68, %s69
    %p78 = scmp.eq.s32.totalorder %s16, 0
    %p79 = por %p77, %p78
    %p80 = scmp.ne.s32.totalorder %s68, %s69
    %p81 = scmp.eq.s32.totalorder %s17, 1
    %p82 = por %p80, %p81
    %p84 = scmp.ne.s32.totalorder %s69, %s83
    %p85 = scmp.eq.s32.totalorder %s17, 0
    %p86 = por %p84, %p85
    %s88 = sadd.s32 %s87, 1
    %p91 = scmp.eq.s32.totalorder %s11, 1
    %p92 = scmp.ne.s32.totalorder %s87, %s89
    %p93 = scmp.eq.s32.totalorder %s11, 0
    %p94 = por %p92, %p93
    %p95 = scmp.ne.s32.totalorder %s87, %s89
    %p96 = scmp.eq.s32.totalorder %s16, 1
    %p97 = por %p95, %p96
    %p98 = scmp.ne.s32.totalorder %s89, %s90
    %p99 = scmp.eq.s32.totalorder %s16, 0
    %p100 = por %p98, %p99
    %p101 = scmp.ne.s32.totalorder %s89, %s90
    %p102 = scmp.eq.s32.totalorder %s17, 1
    %p103 = por %p101, %p102
    %p105 = scmp.ne.s32.totalorder %s90, %s104
    %p106 = scmp.eq.s32.totalorder %s17, 0
    %p107 = por %p105, %p106
    %s109 = sadd.s32 %s108, 1
    %p112 = scmp.eq.s32.totalorder %s11, 1
    %p113 = scmp.ne.s32.totalorder %s108, %s110
    %p114 = scmp.eq.s32.totalorder %s11, 0
    %p115 = por %p113, %p114
    %p116 = scmp.ne.s32.totalorder %s108, %s110
    %p117 = scmp.eq.s32.totalorder %s16, 1
    %p118 = por %p116, %p117
    %p119 = scmp.ne.s32.totalorder %s110, %s111
    %p120 = scmp.eq.s32.totalorder %s16, 0
    %p121 = por %p119, %p120
    %p122 = scmp.ne.s32.totalorder %s110, %s111
    %p123 = scmp.eq.s32.totalorder %s17, 1
    %p124 = por %p122, %p123
    %p126 = scmp.ne.s32.totalorder %s111, %s125
    %p127 = scmp.eq.s32.totalorder %s17, 0
    %p128 = por %p126, %p127
    %s129 = ssub.s32 %s11, %s18
    %p130 = scmp.eq.s32.totalorder %s129, 0
    %s132 = sadd.s32 %s131, 1
    %s133 = scalar_select %p130, %s131, %s132
    %p136 = pneg %p130
    %p137 = scmp.eq.s32.totalorder %s11, 1
    %p138 = por %p136, %p137
    %p139 = scmp.ne.s32.totalorder %s131, %s134
    %p140 = scmp.eq.s32.totalorder %s11, 0
    %p141 = por %p139, %p140
    %p142 = scmp.ne.s32.totalorder %s131, %s134
    %p143 = scmp.eq.s32.totalorder %s16, 1
    %p144 = por %p142, %p143
    %p145 = scmp.ne.s32.totalorder %s134, %s135
    %p146 = scmp.eq.s32.totalorder %s16, 0
    %p147 = por %p145, %p146
    %p148 = scmp.ne.s32.totalorder %s134, %s135
    %p149 = scmp.eq.s32.totalorder %s17, 1
    %p150 = por %p148, %p149
    %p152 = scmp.ne.s32.totalorder %s135, %s151
    %p153 = scmp.eq.s32.totalorder %s17, 0
    %p154 = por %p152, %p153
    %p155 = scmp.le.s32.totalorder 1, %s11
    %p156 = scmp.lt.s32.totalorder %s11, 3
    %p157 = pnand %p155, %p156
    %p158 = pneg %p157
    // Predicated region
    $region9: #{resblock_forward.1} parent=5 // pred_check
      _
    $region10: #{resblock_forward.1} parent=5 // pred_check_branch
      %160 = sbr.rel (%p157) target = $region12
    $region11: #{resblock_forward.1} parent=5 // pred_region
      %s161 = ssub.s32 %s11, 1
      // Predicated region
      $region13: #{resblock_forward.1} parent=11 // pred_check
        %p162 = pneg %p58
      $region14: #{resblock_forward.1} parent=11 // pred_check_branch
        %164 = sbr.rel (%p162) target = $region16
      $region15: #{resblock_forward.1} parent=11 // pred_region
        _
      $region16: #{resblock_forward.1} parent=11 // pred_fallthru
        _
      // Predicated region
      $region17: #{resblock_forward.1} parent=11 // pred_check
        %p165 = pneg %p79
      $region18: #{resblock_forward.1} parent=11 // pred_check_branch
        %167 = sbr.rel (%p165) target = $region20
      $region19: #{resblock_forward.1} parent=11 // pred_region
        _
      $region20: #{resblock_forward.1} parent=11 // pred_fallthru
        _
      // Predicated region
      $region21: #{resblock_forward.1} parent=11 // pred_check
        %p168 = pneg %p100
      $region22: #{resblock_forward.1} parent=11 // pred_check_branch
        %170 = sbr.rel (%p168) target = $region24
      $region23: #{resblock_forward.1} parent=11 // pred_region
        _
      $region24: #{resblock_forward.1} parent=11 // pred_fallthru
        _
      // Predicated region
      $region25: #{resblock_forward.1} parent=11 // pred_check
        %p171 = pneg %p121
      $region26: #{resblock_forward.1} parent=11 // pred_check_branch
        %173 = sbr.rel (%p171) target = $region28
      $region27: #{resblock_forward.1} parent=11 // pred_region
        _
      $region28: #{resblock_forward.1} parent=11 // pred_fallthru
        _
    $region12: #{resblock_forward.1} parent=5 // pred_fallthru
      _
    %p174 = scmp.lt.s32.totalorder %s11, 2
    // Predicated region
    $region29: #{resblock_forward.1} parent=5 // pred_check
      %p175 = pneg %p174
    $region30: #{resblock_forward.1} parent=5 // pred_check_branch
      %177 = sbr.rel (%p175) target = $region32
    $region31: #{resblock_forward.1} parent=5 // pred_region
      // Predicated region
      $region33: #{resblock_forward.1} parent=31 // pred_check
        %p178 = pneg %p31
      $region34: #{resblock_forward.1} parent=31 // pred_check_branch
        %180 = sbr.rel (%p178) target = $region36
      $region35: #{resblock_forward.1} parent=31 // pred_region
        %s181 = smul.u32 2, %s11
        %p182 = scmp.lt.s32.totalorder %s181, 3
        %s183 = scalar_select %p182, %s181, 3
        %s184 = smul.addr %s183, 8
        %s185 = scalar_lea.vmem %s0, %s184
        %s186 = smul.u32 2, %s11
      $region36: #{resblock_forward.1} parent=31 // pred_fallthru
        _
    $region32: #{resblock_forward.1} parent=5 // pred_fallthru
      _
    %p187 = scmp.le.s32.totalorder 1, %s11
    %p188 = scmp.lt.s32.totalorder %s11, 3
    %p189 = pnand %p187, %p188
    %p190 = pneg %p189
    // Predicated region
    $region37: #{resblock_forward.1} parent=5 // pred_check
      _
    $region38: #{resblock_forward.1} parent=5 // pred_check_branch
      %192 = sbr.rel (%p189) target = $region40
    $region39: #{resblock_forward.1} parent=5 // pred_region
      %s193 = ssub.s32 %s11, 1
      %s194 = smul.u32 2, %s16
      %p195 = scmp.lt.s32.totalorder %s194, 3
      %s196 = scalar_select %p195, %s194, 3
      %s197 = smul.addr %s196, 8
      %s198 = scalar_lea.vmem %s0, %s197
      %p199 = pneg %p37
      %p200 = pneg %p34
      %p201 = pneg %p58
      %p202 = pneg %p55
      %p203 = pneg %p79
      %p204 = pneg %p76
      %p205 = pneg %p100
      %p206 = pneg %p97
      %p207 = pneg %p121
      %p208 = pneg %p118
      %p209 = pneg %p147
      %p210 = pneg %p144
      %s211 = smul.u32 2, %s16
      %p212 = scmp.lt.s32.totalorder %s211, 3
      %s213 = scalar_select %p212, %s211, 3
      %s214 = smul.addr %s213, 8
      %s215 = scalar_lea.vmem %s5, %s214
      %s216 = smul.u32 2, %s16
      %p217 = scmp.lt.s32.totalorder %s216, 3
      %s218 = scalar_select %p217, %s216, 3
      %s219 = smul.addr %s218, 8
      %s220 = scalar_lea.vmem %s0, %s219
      %s221 = smul.u32 2, %s16
      %s222 = smul.u32 2, %s16
      %p223 = scmp.lt.s32.totalorder %s222, 3
      %s224 = scalar_select %p223, %s222, 3
      %s225 = smul.addr %s224, 8
      %s226 = scalar_lea.vmem %s5, %s225
      %s227 = smul.u32 2, %s16
      %v228 = vld [vmem:[%s220] sm:$0xff]
      %v229 = vld [vmem:[%s220 + $0x8] sm:$0xff]
      %v230 = vlaneseq
      %v231 = vshrl.u32 %v230, 7
      %v232 = vadd.s32 %v231, 8
      %v233 = vlaneseq
      %v234 = vand.u32 %v233, 127
      %v235 = vsub.s32 %v231, 1
      %v236 = vsub.s32 %v232, 1
      %vm237 = vcmp.eq.s32.totalorder %v234, %v235
      %vm238 = vcmp.eq.s32.totalorder %v234, %v236
      %vm239 = vcmp.lt.s32.totalorder %v231, 0
      %v240 = vsub.s32 0, %v231
      %v241 = vsel %vm239, %v240, %v231
      %v242 = vshrl.u32 %v241, 4
      %v243 = vand.u32 %v241, 15
      %v244 = vsub.s32 0, %v243
      %v245 = vsel %vm239, %v244, %v243
      %vm246 = vcmp.lt.s32.totalorder %v232, 0
      %v247 = vsub.s32 0, %v232
      %v248 = vsel %vm246, %v247, %v232
      %v249 = vshrl.u32 %v248, 4
      %v250 = vand.u32 %v248, 15
      %v251 = vsub.s32 0, %v250
      %v252 = vsel %vm246, %v251, %v250
      %vm253 = vcmp.ne.s32.totalorder %v245, 0
      %vm254 = vcmp.ne.s32.totalorder %v252, 0
      %vm255 = vcmp.lt.s32.totalorder %v245, 0
      %vm256 = vcmp.lt.s32.totalorder %v252, 0
      %vm257 = vmand %vm255, %vm253
      %vm258 = vmand %vm256, %vm254
      %v259 = vadd.s32 %v245, 16
      %v260 = vadd.s32 %v252, 16
      %v261 = vsel %vm257, %v259, %v245
      %v262 = vsel %vm258, %v260, %v252
      %vm263 = vcmp.ne.s32.totalorder %v261, 0
      %vm264 = vcmp.ne.s32.totalorder %v262, 0
      %vm265 = vmand %vm237, %vm263
      %vm266 = vmand %vm238, %vm264
      %v267 = vsel %vm265, 1, 0
      %v268 = vsel %vm266, 1, 0
      %v269 = vcvt.s32.f32 %v267
      %v270 = vcvt.s32.f32 %v268
      %v271 = vadd.s32 %v231, 1
      %v272 = vadd.s32 %v232, 1
      %vm273 = vcmp.eq.s32.totalorder %v234, %v271
      %vm274 = vcmp.eq.s32.totalorder %v234, %v272
      %vm275 = vcmp.ne.s32.totalorder %v261, 15
      %vm276 = vcmp.ne.s32.totalorder %v262, 15
      %vm277 = vmand %vm273, %vm275
      %vm278 = vmand %vm274, %vm276
      %v279 = vsel %vm277, 1, 0
      %v280 = vsel %vm278, 1, 0
      %v281 = vcvt.s32.f32 %v279
      %v282 = vcvt.s32.f32 %v280
      %v283 = vld [vmem:[%s1] sm:$0xff]
      %v284 = vld [vmem:[%s1 + $0x8] sm:$0xff]
      %v285 = vld [vmem:[%s1 + $0x10] sm:$0xff]
      %v286 = vld [vmem:[%s1 + $0x18] sm:$0xff]
      %v287 = vld [vmem:[%s1 + $0x20] sm:$0xff]
      %v288 = vld [vmem:[%s1 + $0x28] sm:$0xff]
      %v289 = vld [vmem:[%s1 + $0x30] sm:$0xff]
      %v290 = vld [vmem:[%s1 + $0x38] sm:$0xff]
      %v291 = vld [vmem:[%s1 + $0x40] sm:$0xff]
      %v292 = vld [vmem:[%s1 + $0x48] sm:$0xff]
      %v293 = vld [vmem:[%s1 + $0x50] sm:$0xff]
      %v294 = vld [vmem:[%s1 + $0x58] sm:$0xff]
      %v295 = vld [vmem:[%s1 + $0x60] sm:$0xff]
      %v296 = vld [vmem:[%s1 + $0x68] sm:$0xff]
      %v297 = vld [vmem:[%s1 + $0x70] sm:$0xff]
      %v298 = vld [vmem:[%s1 + $0x78] sm:$0xff]
      %v299 = vld [vmem:[%s1 + $0x80] sm:$0xff]
      %v300 = vld [vmem:[%s1 + $0x88] sm:$0xff]
      %v301 = vld [vmem:[%s1 + $0x90] sm:$0xff]
      %v302 = vld [vmem:[%s1 + $0x98] sm:$0xff]
      %v303 = vld [vmem:[%s1 + $0xa0] sm:$0xff]
      %v304 = vld [vmem:[%s1 + $0xa8] sm:$0xff]
      %v305 = vld [vmem:[%s1 + $0xb0] sm:$0xff]
      %v306 = vld [vmem:[%s1 + $0xb8] sm:$0xff]
      %v307 = vld [vmem:[%s1 + $0xc0] sm:$0xff]
      %v308 = vld [vmem:[%s1 + $0xc8] sm:$0xff]
      %v309 = vld [vmem:[%s1 + $0xd0] sm:$0xff]
      %v310 = vld [vmem:[%s1 + $0xd8] sm:$0xff]
      %v311 = vld [vmem:[%s1 + $0xe0] sm:$0xff]
      %v312 = vld [vmem:[%s1 + $0xe8] sm:$0xff]
      %v313 = vld [vmem:[%s1 + $0xf0] sm:$0xff]
      %v314 = vld [vmem:[%s1 + $0xf8] sm:$0xff]
      %v315 = vld [vmem:[%s1 + $0x100] sm:$0xff]
      %v316 = vld [vmem:[%s1 + $0x108] sm:$0xff]
      %v317 = vld [vmem:[%s1 + $0x110] sm:$0xff]
      %v318 = vld [vmem:[%s1 + $0x118] sm:$0xff]
      %v319 = vld [vmem:[%s1 + $0x120] sm:$0xff]
      %v320 = vld [vmem:[%s1 + $0x128] sm:$0xff]
      %v321 = vld [vmem:[%s1 + $0x130] sm:$0xff]
      %v322 = vld [vmem:[%s1 + $0x138] sm:$0xff]
      %v323 = vld [vmem:[%s1 + $0x140] sm:$0xff]
      %v324 = vld [vmem:[%s1 + $0x148] sm:$0xff]
      %v325 = vld [vmem:[%s1 + $0x150] sm:$0xff]
      %v326 = vld [vmem:[%s1 + $0x158] sm:$0xff]
      %v327 = vld [vmem:[%s1 + $0x160] sm:$0xff]
      %v328 = vld [vmem:[%s1 + $0x168] sm:$0xff]
      %v329 = vld [vmem:[%s1 + $0x170] sm:$0xff]
      %v330 = vld [vmem:[%s1 + $0x178] sm:$0xff]
      %331 = vmatprep.subr.mxu0 %v284
      %332 = vmatpush1.msra.mxu0 %v283
      %333 = vmatprep.subr.mxu0 %v287
      %334 = vmatpush1.msra.mxu0 %v286
      %335 = vmatprep.subr.mxu0 %v290
      %336 = vmatpush1.msra.mxu0 %v289
      %337 = vmatprep.subr.mxu0 %v293
      %338 = vmatpush1.msra.mxu0 %v292
      %339 = vmatprep.subr.mxu0 %v296
      %340 = vmatpush1.msra.mxu0 %v295
      %341 = vmatprep.subr.mxu0 %v299
      %342 = vmatpush1.msra.mxu0 %v298
      %343 = vmatprep.subr.mxu0 %v302
      %344 = vmatpush1.msra.mxu0 %v301
      %345 = vmatprep.subr.mxu0 %v305
      %346 = vmatpush1.msra.mxu0 %v304
      %347 = vmatprep.subr.mxu0 %v308
      %348 = vmatpush1.msra.mxu0 %v307
      %349 = vmatprep.subr.mxu0 %v311
      %350 = vmatpush1.msra.mxu0 %v310
      %351 = vmatprep.subr.mxu0 %v314
      %352 = vmatpush1.msra.mxu0 %v313
      %353 = vmatprep.subr.mxu0 %v317
      %354 = vmatpush1.msra.mxu0 %v316
      %355 = vmatprep.subr.mxu0 %v320
      %356 = vmatpush1.msra.mxu0 %v319
      %357 = vmatprep.subr.mxu0 %v323
      %358 = vmatpush1.msra.mxu0 %v322
      %359 = vmatprep.subr.mxu0 %v326
      %360 = vmatpush1.msra.mxu0 %v325
      %361 = vmatprep.subr.mxu0 %v329
      %362 = vmatpush1.msra.mxu0 %v328
      %363 = vmatprep.subr.mxu0 0.0
      %364 = vmatpush1.msra.mxu0 0.0
      %365 = vmatprep.subr.mxu0 0.0
      %366 = vmatpush1.msra.mxu0 0.0
      %367 = vmatprep.subr.mxu0 0.0
      %368 = vmatpush1.msra.mxu0 0.0
      %369 = vmatprep.subr.mxu0 0.0
      %370 = vmatpush1.msra.mxu0 0.0
      %371 = vmatprep.subr.mxu0 0.0
      %372 = vmatpush1.msra.mxu0 0.0
      %373 = vmatprep.subr.mxu0 0.0
      %374 = vmatpush1.msra.mxu0 0.0
      %375 = vmatprep.subr.mxu0 0.0
      %376 = vmatpush1.msra.mxu0 0.0
      %377 = vmatprep.subr.mxu0 0.0
      %378 = vmatpush1.msra.mxu0 0.0
      %379 = vmatprep.subr.mxu0 0.0
      %380 = vmatpush1.msra.mxu0 0.0
      %381 = vmatprep.subr.mxu0 0.0
      %382 = vmatpush1.msra.mxu0 0.0
      %383 = vmatprep.subr.mxu0 0.0
      %384 = vmatpush1.msra.mxu0 0.0
      %385 = vmatprep.subr.mxu0 0.0
      %386 = vmatpush1.msra.mxu0 0.0
      %387 = vmatprep.subr.mxu0 0.0
      %388 = vmatpush1.msra.mxu0 0.0
      %389 = vmatprep.subr.mxu0 0.0
      %390 = vmatpush1.msra.mxu0 0.0
      %391 = vmatprep.subr.mxu0 0.0
      %392 = vmatpush1.msra.mxu0 0.0
      %393 = vmatprep.subr.mxu0 0.0
      %394 = vmatpush1.msra.mxu0 0.0
      %395 = vmatprep.mubr.f32.mxu0 0.0
      %396 = vmatmul.mubr.f32.gmra.mrb[0].mxu0 %v228
      %v397 = vpop.f32.mrb[0].mxu0
      %v398 = vadd.f32 0.0, %v397
      %v399 = vpop.f32.mrb[0].mxu0
      %v400 = vadd.f32 0.0, %v399
      %401 = vmatprep.mubr.f32.mxu0 0.0
      %402 = vmatmul.mubr.f32.gmra.mrb[0].mxu0 %v229
      %v403 = vpop.f32.mrb[0].mxu0
      %v404 = vadd.f32 0.0, %v403
      %v405 = vpop.f32.mrb[0].mxu0
      %v406 = vadd.f32 0.0, %v405
      %407 = vdwg.mxu0
      %408 = vmatprep.subr.mxu0 0.0
      %409 = vmatpush1.msra.mxu0 %v285
      %410 = vmatprep.subr.mxu0 0.0
      %411 = vmatpush1.msra.mxu0 %v288
      %412 = vmatprep.subr.mxu0 0.0
      %413 = vmatpush1.msra.mxu0 %v291
      %414 = vmatprep.subr.mxu0 0.0
      %415 = vmatpush1.msra.mxu0 %v294
      %416 = vmatprep.subr.mxu0 0.0
      %417 = vmatpush1.msra.mxu0 %v297
      %418 = vmatprep.subr.mxu0 0.0
      %419 = vmatpush1.msra.mxu0 %v300
      %420 = vmatprep.subr.mxu0 0.0
      %421 = vmatpush1.msra.mxu0 %v303
      %422 = vmatprep.subr.mxu0 0.0
      %423 = vmatpush1.msra.mxu0 %v306
      %424 = vmatprep.subr.mxu0 0.0
      %425 = vmatpush1.msra.mxu0 %v309
      %426 = vmatprep.subr.mxu0 0.0
      %427 = vmatpush1.msra.mxu0 %v312
      %428 = vmatprep.subr.mxu0 0.0
      %429 = vmatpush1.msra.mxu0 %v315
      %430 = vmatprep.subr.mxu0 0.0
      %431 = vmatpush1.msra.mxu0 %v318
      %432 = vmatprep.subr.mxu0 0.0
      %433 = vmatpush1.msra.mxu0 %v321
      %434 = vmatprep.subr.mxu0 0.0
      %435 = vmatpush1.msra.mxu0 %v324
      %436 = vmatprep.subr.mxu0 0.0
      %437 = vmatpush1.msra.mxu0 %v327
      %438 = vmatprep.subr.mxu0 0.0
      %439 = vmatpush1.msra.mxu0 %v330
      %440 = vmatprep.subr.mxu0 0.0
      %441 = vmatpush1.msra.mxu0 0.0
      %442 = vmatprep.subr.mxu0 0.0
      %443 = vmatpush1.msra.mxu0 0.0
      %444 = vmatprep.subr.mxu0 0.0
      %445 = vmatpush1.msra.mxu0 0.0
      %446 = vmatprep.subr.mxu0 0.0
      %447 = vmatpush1.msra.mxu0 0.0
      %448 = vmatprep.subr.mxu0 0.0
      %449 = vmatpush1.msra.mxu0 0.0
      %450 = vmatprep.subr.mxu0 0.0
      %451 = vmatpush1.msra.mxu0 0.0
      %452 = vmatprep.subr.mxu0 0.0
      %453 = vmatpush1.msra.mxu0 0.0
      %454 = vmatprep.subr.mxu0 0.0
      %455 = vmatpush1.msra.mxu0 0.0
      %456 = vmatprep.subr.mxu0 0.0
      %457 = vmatpush1.msra.mxu0 0.0
      %458 = vmatprep.subr.mxu0 0.0
      %459 = vmatpush1.msra.mxu0 0.0
      %460 = vmatprep.subr.mxu0 0.0
      %461 = vmatpush1.msra.mxu0 0.0
      %462 = vmatprep.subr.mxu0 0.0
      %463 = vmatpush1.msra.mxu0 0.0
      %464 = vmatprep.subr.mxu0 0.0
      %465 = vmatpush1.msra.mxu0 0.0
      %466 = vmatprep.subr.mxu0 0.0
      %467 = vmatpush1.msra.mxu0 0.0
      %468 = vmatprep.subr.mxu0 0.0
      %469 = vmatpush1.msra.mxu0 0.0
      %470 = vmatprep.subr.mxu0 0.0
      %471 = vmatpush1.msra.mxu0 0.0
      %472 = vmatprep.mubr.f32.mxu0 0.0
      %473 = vmatmul.mubr.f32.gmra.mrb[0].mxu0 %v228
      %v474 = vpop.f32.mrb[0].mxu0
      %v475 = vadd.f32 0.0, %v474
      %v476 = vpop.f32.mrb[0].mxu0
      %477 = vmatprep.mubr.f32.mxu0 0.0
      %478 = vmatmul.mubr.f32.gmra.mrb[0].mxu0 %v229
      %v479 = vpop.f32.mrb[0].mxu0
      %v480 = vadd.f32 0.0, %v479
      %v481 = vpop.f32.mrb[0].mxu0
      %482 = vdwg.mxu0
      %vm483 = vcmask 130048
      %v485 = vsel %vm483, %v269, 0
      %v488 = vsel %vm483, %v270, 0
      %490 = vmatprep.subr.mxu0 0.0
      %491 = vmatpush1.msra.mxu0 %v398
      %492 = vmatprep.subr.mxu0 0.0
      %493 = vmatpush1.msra.mxu0 %v404
      %494 = vmatprep.subr.mxu0 0.0
      %495 = vmatpush1.msra.mxu0 0.0
      %496 = vmatprep.subr.mxu0 0.0
      %497 = vmatpush1.msra.mxu0 0.0
      %498 = vmatprep.subr.mxu0 0.0
      %499 = vmatpush1.msra.mxu0 0.0
      %500 = vmatprep.subr.mxu0 0.0
      %501 = vmatpush1.msra.mxu0 0.0
      %502 = vmatprep.subr.mxu0 0.0
      %503 = vmatpush1.msra.mxu0 0.0
      %504 = vmatprep.subr.mxu0 0.0
      %505 = vmatpush1.msra.mxu0 0.0
      %506 = vmatprep.subr.mxu0 0.0
      %507 = vmatpush1.msra.mxu0 0.0
      %508 = vmatprep.subr.mxu0 0.0
      %509 = vmatpush1.msra.mxu0 0.0
      %510 = vmatprep.subr.mxu0 0.0
      %511 = vmatpush1.msra.mxu0 0.0
      %512 = vmatprep.subr.mxu0 0.0
      %513 = vmatpush1.msra.mxu0 0.0
      %514 = vmatprep.subr.mxu0 0.0
      %515 = vmatpush1.msra.mxu0 0.0
      %516 = vmatprep.subr.mxu0 0.0
      %517 = vmatpush1.msra.mxu0 0.0
      %518 = vmatprep.subr.mxu0 0.0
      %519 = vmatpush1.msra.mxu0 0.0
      %520 = vmatprep.subr.mxu0 0.0
      %521 = vmatpush1.msra.mxu0 0.0
      %522 = vmatprep.subr.mxu0 0.0
      %523 = vmatpush1.msra.mxu0 0.0
      %524 = vmatprep.subr.mxu0 0.0
      %525 = vmatpush1.msra.mxu0 0.0
      %526 = vmatprep.subr.mxu0 0.0
      %527 = vmatpush1.msra.mxu0 0.0
      %528 = vmatprep.subr.mxu0 0.0
      %529 = vmatpush1.msra.mxu0 0.0
      %530 = vmatprep.subr.mxu0 0.0
      %531 = vmatpush1.msra.mxu0 0.0
      %532 = vmatprep.subr.mxu0 0.0
      %533 = vmatpush1.msra.mxu0 0.0
      %534 = vmatprep.subr.mxu0 0.0
      %535 = vmatpush1.msra.mxu0 0.0
      %536 = vmatprep.subr.mxu0 0.0
      %537 = vmatpush1.msra.mxu0 0.0
      %538 = vmatprep.subr.mxu0 0.0
      %539 = vmatpush1.msra.mxu0 0.0
      %540 = vmatprep.subr.mxu0 0.0
      %541 = vmatpush1.msra.mxu0 0.0
      %542 = vmatprep.subr.mxu0 0.0
      %543 = vmatpush1.msra.mxu0 0.0
      %544 = vmatprep.subr.mxu0 0.0
      %545 = vmatpush1.msra.mxu0 0.0
      %546 = vmatprep.subr.mxu0 0.0
      %547 = vmatpush1.msra.mxu0 0.0
      %548 = vmatprep.subr.mxu0 0.0
      %549 = vmatpush1.msra.mxu0 0.0
      %550 = vmatprep.subr.mxu0 0.0
      %551 = vmatpush1.msra.mxu0 0.0
      %552 = vmatprep.subr.mxu0 0.0
      %553 = vmatpush1.msra.mxu0 0.0
      %554 = vmatprep.mubr.f32.mxu0 0.0
      %555 = vmatmul.mubr.f32.gmra.mrb[0].mxu0 %v485
      %v556 = vpop.f32.mrb[0].mxu0
      %v557 = vadd.f32 %v400, %v556
      %v558 = vpop.f32.mrb[0].mxu0
      %559 = vmatprep.mubr.f32.mxu0 0.0
      %560 = vmatmul.mubr.f32.gmra.mrb[0].mxu0 %v488
      %v561 = vpop.f32.mrb[0].mxu0
      %v562 = vadd.f32 %v406, %v561
      %v563 = vpop.f32.mrb[0].mxu0
      %564 = vdwg.mxu0
      %v566 = vsel %vm483, %v281, 0
      %v569 = vsel %vm483, %v282, 0
      %571 = vmatprep.subr.mxu0 0.0
      %572 = vmatpush1.msra.mxu0 %v475
      %573 = vmatprep.subr.mxu0 0.0
      %574 = vmatpush1.msra.mxu0 %v480
      %575 = vmatprep.subr.mxu0 0.0
      %576 = vmatpush1.msra.mxu0 0.0
      %577 = vmatprep.subr.mxu0 0.0
      %578 = vmatpush1.msra.mxu0 0.0
      %579 = vmatprep.subr.mxu0 0.0
      %580 = vmatpush1.msra.mxu0 0.0
      %581 = vmatprep.subr.mxu0 0.0
      %582 = vmatpush1.msra.mxu0 0.0
      %583 = vmatprep.subr.mxu0 0.0
      %584 = vmatpush1.msra.mxu0 0.0
      %585 = vmatprep.subr.mxu0 0.0
      %586 = vmatpush1.msra.mxu0 0.0
      %587 = vmatprep.subr.mxu0 0.0
      %588 = vmatpush1.msra.mxu0 0.0
      %589 = vmatprep.subr.mxu0 0.0
      %590 = vmatpush1.msra.mxu0 0.0
      %591 = vmatprep.subr.mxu0 0.0
      %592 = vmatpush1.msra.mxu0 0.0
      %593 = vmatprep.subr.mxu0 0.0
      %594 = vmatpush1.msra.mxu0 0.0
      %595 = vmatprep.subr.mxu0 0.0
      %596 = vmatpush1.msra.mxu0 0.0
      %597 = vmatprep.subr.mxu0 0.0
      %598 = vmatpush1.msra.mxu0 0.0
      %599 = vmatprep.subr.mxu0 0.0
      %600 = vmatpush1.msra.mxu0 0.0
      %601 = vmatprep.subr.mxu0 0.0
      %602 = vmatpush1.msra.mxu0 0.0
      %603 = vmatprep.subr.mxu0 0.0
      %604 = vmatpush1.msra.mxu0 0.0
      %605 = vmatprep.subr.mxu0 0.0
      %606 = vmatpush1.msra.mxu0 0.0
      %607 = vmatprep.subr.mxu0 0.0
      %608 = vmatpush1.msra.mxu0 0.0
      %609 = vmatprep.subr.mxu0 0.0
      %610 = vmatpush1.msra.mxu0 0.0
      %611 = vmatprep.subr.mxu0 0.0
      %612 = vmatpush1.msra.mxu0 0.0
      %613 = vmatprep.subr.mxu0 0.0
      %614 = vmatpush1.msra.mxu0 0.0
      %615 = vmatprep.subr.mxu0 0.0
      %616 = vmatpush1.msra.mxu0 0.0
      %617 = vmatprep.subr.mxu0 0.0
      %618 = vmatpush1.msra.mxu0 0.0
      %619 = vmatprep.subr.mxu0 0.0
      %620 = vmatpush1.msra.mxu0 0.0
      %621 = vmatprep.subr.mxu0 0.0
      %622 = vmatpush1.msra.mxu0 0.0
      %623 = vmatprep.subr.mxu0 0.0
      %624 = vmatpush1.msra.mxu0 0.0
      %625 = vmatprep.subr.mxu0 0.0
      %626 = vmatpush1.msra.mxu0 0.0
      %627 = vmatprep.subr.mxu0 0.0
      %628 = vmatpush1.msra.mxu0 0.0
      %629 = vmatprep.subr.mxu0 0.0
      %630 = vmatpush1.msra.mxu0 0.0
      %631 = vmatprep.subr.mxu0 0.0
      %632 = vmatpush1.msra.mxu0 0.0
      %633 = vmatprep.subr.mxu0 0.0
      %634 = vmatpush1.msra.mxu0 0.0
      %635 = vmatprep.mubr.f32.mxu0 0.0
      %636 = vmatmul.mubr.f32.gmra.mrb[0].mxu0 %v566
      %v637 = vpop.f32.mrb[0].mxu0
      %v638 = vadd.f32 0.0, %v637
      %v639 = vpop.f32.mrb[0].mxu0
      %640 = vmatprep.mubr.f32.mxu0 0.0
      %641 = vmatmul.mubr.f32.gmra.mrb[0].mxu0 %v569
      %v642 = vpop.f32.mrb[0].mxu0
      %v643 = vadd.f32 0.0, %v642
      %v644 = vpop.f32.mrb[0].mxu0
      %645 = vdwg.mxu0
      %v646 = vadd.f32 %v557, %v638
      %v647 = vadd.f32 %v562, %v643
      %v648 = vld [vmem:[%s2] sm:$0x1]
      %v650 = vlaneseq
      %v651 = vshrl.u32 %v650, 7
      %v652 = vsub.s32 0, %v651
      %v653 = vrot.slane %v648, %v652
      %v655 = vadd.f32 %v646, %v653
      %v656 = vadd.f32 %v647, %v653
      %v657 = vmax.f32 %v655, 0.0
      %v658 = vmax.f32 %v656, 0.0
      %v659 = vld [vmem:[%s3] sm:$0xff]
      %v660 = vld [vmem:[%s3 + $0x8] sm:$0xff]
      %v661 = vld [vmem:[%s3 + $0x10] sm:$0xff]
      %v662 = vld [vmem:[%s3 + $0x18] sm:$0xff]
      %v663 = vld [vmem:[%s3 + $0x20] sm:$0xff]
      %v664 = vld [vmem:[%s3 + $0x28] sm:$0xff]
      %v665 = vld [vmem:[%s3 + $0x30] sm:$0xff]
      %v666 = vld [vmem:[%s3 + $0x38] sm:$0xff]
      %v667 = vld [vmem:[%s3 + $0x40] sm:$0xff]
      %v668 = vld [vmem:[%s3 + $0x48] sm:$0xff]
      %v669 = vld [vmem:[%s3 + $0x50] sm:$0xff]
      %v670 = vld [vmem:[%s3 + $0x58] sm:$0xff]
      %v671 = vld [vmem:[%s3 + $0x60] sm:$0xff]
      %v672 = vld [vmem:[%s3 + $0x68] sm:$0xff]
      %v673 = vld [vmem:[%s3 + $0x70] sm:$0xff]
      %v674 = vld [vmem:[%s3 + $0x78] sm:$0xff]
      %v675 = vld [vmem:[%s3 + $0x80] sm:$0xff]
      %v676 = vld [vmem:[%s3 + $0x88] sm:$0xff]
      %v677 = vld [vmem:[%s3 + $0x90] sm:$0xff]
      %v678 = vld [vmem:[%s3 + $0x98] sm:$0xff]
      %v679 = vld [vmem:[%s3 + $0xa0] sm:$0xff]
      %v680 = vld [vmem:[%s3 + $0xa8] sm:$0xff]
      %v681 = vld [vmem:[%s3 + $0xb0] sm:$0xff]
      %v682 = vld [vmem:[%s3 + $0xb8] sm:$0xff]
      %v683 = vld [vmem:[%s3 + $0xc0] sm:$0xff]
      %v684 = vld [vmem:[%s3 + $0xc8] sm:$0xff]
      %v685 = vld [vmem:[%s3 + $0xd0] sm:$0xff]
      %v686 = vld [vmem:[%s3 + $0xd8] sm:$0xff]
      %v687 = vld [vmem:[%s3 + $0xe0] sm:$0xff]
      %v688 = vld [vmem:[%s3 + $0xe8] sm:$0xff]
      %v689 = vld [vmem:[%s3 + $0xf0] sm:$0xff]
      %v690 = vld [vmem:[%s3 + $0xf8] sm:$0xff]
      %v691 = vld [vmem:[%s3 + $0x100] sm:$0xff]
      %v692 = vld [vmem:[%s3 + $0x108] sm:$0xff]
      %v693 = vld [vmem:[%s3 + $0x110] sm:$0xff]
      %v694 = vld [vmem:[%s3 + $0x118] sm:$0xff]
      %v695 = vld [vmem:[%s3 + $0x120] sm:$0xff]
      %v696 = vld [vmem:[%s3 + $0x128] sm:$0xff]
      %v697 = vld [vmem:[%s3 + $0x130] sm:$0xff]
      %v698 = vld [vmem:[%s3 + $0x138] sm:$0xff]
      %v699 = vld [vmem:[%s3 + $0x140] sm:$0xff]
      %v700 = vld [vmem:[%s3 + $0x148] sm:$0xff]
      %v701 = vld [vmem:[%s3 + $0x150] sm:$0xff]
      %v702 = vld [vmem:[%s3 + $0x158] sm:$0xff]
      %v703 = vld [vmem:[%s3 + $0x160] sm:$0xff]
      %v704 = vld [vmem:[%s3 + $0x168] sm:$0xff]
      %v705 = vld [vmem:[%s3 + $0x170] sm:$0xff]
      %v706 = vld [vmem:[%s3 + $0x178] sm:$0xff]
      %707 = vmatprep.subr.mxu0 %v660
      %708 = vmatpush1.msra.mxu0 %v659
      %709 = vmatprep.subr.mxu0 %v663
      %710 = vmatpush1.msra.mxu0 %v662
      %711 = vmatprep.subr.mxu0 %v666
      %712 = vmatpush1.msra.mxu0 %v665
      %713 = vmatprep.subr.mxu0 %v669
      %714 = vmatpush1.msra.mxu0 %v668
      %715 = vmatprep.subr.mxu0 %v672
      %716 = vmatpush1.msra.mxu0 %v671
      %717 = vmatprep.subr.mxu0 %v675
      %718 = vmatpush1.msra.mxu0 %v674
      %719 = vmatprep.subr.mxu0 %v678
      %720 = vmatpush1.msra.mxu0 %v677
      %721 = vmatprep.subr.mxu0 %v681
      %722 = vmatpush1.msra.mxu0 %v680
      %723 = vmatprep.subr.mxu0 %v684
      %724 = vmatpush1.msra.mxu0 %v683
      %725 = vmatprep.subr.mxu0 %v687
      %726 = vmatpush1.msra.mxu0 %v686
      %727 = vmatprep.subr.mxu0 %v690
      %728 = vmatpush1.msra.mxu0 %v689
      %729 = vmatprep.subr.mxu0 %v693
      %730 = vmatpush1.msra.mxu0 %v692
      %731 = vmatprep.subr.mxu0 %v696
      %732 = vmatpush1.msra.mxu0 %v695
      %733 = vmatprep.subr.mxu0 %v699
      %734 = vmatpush1.msra.mxu0 %v698
      %735 = vmatprep.subr.mxu0 %v702
      %736 = vmatpush1.msra.mxu0 %v701
      %737 = vmatprep.subr.mxu0 %v705
      %738 = vmatpush1.msra.mxu0 %v704
      %739 = vmatprep.subr.mxu0 0.0
      %740 = vmatpush1.msra.mxu0 0.0
      %741 = vmatprep.subr.mxu0 0.0
      %742 = vmatpush1.msra.mxu0 0.0
      %743 = vmatprep.subr.mxu0 0.0
      %744 = vmatpush1.msra.mxu0 0.0
      %745 = vmatprep.subr.mxu0 0.0
      %746 = vmatpush1.msra.mxu0 0.0
      %747 = vmatprep.subr.mxu0 0.0
      %748 = vmatpush1.msra.mxu0 0.0
      %749 = vmatprep.subr.mxu0 0.0
      %750 = vmatpush1.msra.mxu0 0.0
      %751 = vmatprep.subr.mxu0 0.0
      %752 = vmatpush1.msra.mxu0 0.0
      %753 = vmatprep.subr.mxu0 0.0
      %754 = vmatpush1.msra.mxu0 0.0
      %755 = vmatprep.subr.mxu0 0.0
      %756 = vmatpush1.msra.mxu0 0.0
      %757 = vmatprep.subr.mxu0 0.0
      %758 = vmatpush1.msra.mxu0 0.0
      %759 = vmatprep.subr.mxu0 0.0
      %760 = vmatpush1.msra.mxu0 0.0
      %761 = vmatprep.subr.mxu0 0.0
      %762 = vmatpush1.msra.mxu0 0.0
      %763 = vmatprep.subr.mxu0 0.0
      %764 = vmatpush1.msra.mxu0 0.0
      %765 = vmatprep.subr.mxu0 0.0
      %766 = vmatpush1.msra.mxu0 0.0
      %767 = vmatprep.subr.mxu0 0.0
      %768 = vmatpush1.msra.mxu0 0.0
      %769 = vmatprep.subr.mxu0 0.0
      %770 = vmatpush1.msra.mxu0 0.0
      %771 = vmatprep.mubr.f32.mxu0 0.0
      %772 = vmatmul.mubr.f32.gmra.mrb[0].mxu0 %v657
      %v773 = vpop.f32.mrb[0].mxu0
      %v774 = vadd.f32 0.0, %v773
      %v775 = vpop.f32.mrb[0].mxu0
      %v776 = vadd.f32 0.0, %v775
      %777 = vmatprep.mubr.f32.mxu0 0.0
      %778 = vmatmul.mubr.f32.gmra.mrb[0].mxu0 %v658
      %v779 = vpop.f32.mrb[0].mxu0
      %v780 = vadd.f32 0.0, %v779
      %v781 = vpop.f32.mrb[0].mxu0
      %v782 = vadd.f32 0.0, %v781
      %783 = vdwg.mxu0
      %784 = vmatprep.subr.mxu0 0.0
      %785 = vmatpush1.msra.mxu0 %v661
      %786 = vmatprep.subr.mxu0 0.0
      %787 = vmatpush1.msra.mxu0 %v664
      %788 = vmatprep.subr.mxu0 0.0
      %789 = vmatpush1.msra.mxu0 %v667
      %790 = vmatprep.subr.mxu0 0.0
      %791 = vmatpush1.msra.mxu0 %v670
      %792 = vmatprep.subr.mxu0 0.0
      %793 = vmatpush1.msra.mxu0 %v673
      %794 = vmatprep.subr.mxu0 0.0
      %795 = vmatpush1.msra.mxu0 %v676
      %796 = vmatprep.subr.mxu0 0.0
      %797 = vmatpush1.msra.mxu0 %v679
      %798 = vmatprep.subr.mxu0 0.0
      %799 = vmatpush1.msra.mxu0 %v682
      %800 = vmatprep.subr.mxu0 0.0
      %801 = vmatpush1.msra.mxu0 %v685
      %802 = vmatprep.subr.mxu0 0.0
      %803 = vmatpush1.msra.mxu0 %v688
      %804 = vmatprep.subr.mxu0 0.0
      %805 = vmatpush1.msra.mxu0 %v691
      %806 = vmatprep.subr.mxu0 0.0
      %807 = vmatpush1.msra.mxu0 %v694
      %808 = vmatprep.subr.mxu0 0.0
      %809 = vmatpush1.msra.mxu0 %v697
      %810 = vmatprep.subr.mxu0 0.0
      %811 = vmatpush1.msra.mxu0 %v700
      %812 = vmatprep.subr.mxu0 0.0
      %813 = vmatpush1.msra.mxu0 %v703
      %814 = vmatprep.subr.mxu0 0.0
      %815 = vmatpush1.msra.mxu0 %v706
      %816 = vmatprep.subr.mxu0 0.0
      %817 = vmatpush1.msra.mxu0 0.0
      %818 = vmatprep.subr.mxu0 0.0
      %819 = vmatpush1.msra.mxu0 0.0
      %820 = vmatprep.subr.mxu0 0.0
      %821 = vmatpush1.msra.mxu0 0.0
      %822 = vmatprep.subr.mxu0 0.0
      %823 = vmatpush1.msra.mxu0 0.0
      %824 = vmatprep.subr.mxu0 0.0
      %825 = vmatpush1.msra.mxu0 0.0
      %826 = vmatprep.subr.mxu0 0.0
      %827 = vmatpush1.msra.mxu0 0.0
      %828 = vmatprep.subr.mxu0 0.0
      %829 = vmatpush1.msra.mxu0 0.0
      %830 = vmatprep.subr.mxu0 0.0
      %831 = vmatpush1.msra.mxu0 0.0
      %832 = vmatprep.subr.mxu0 0.0
      %833 = vmatpush1.msra.mxu0 0.0
      %834 = vmatprep.subr.mxu0 0.0
      %835 = vmatpush1.msra.mxu0 0.0
      %836 = vmatprep.subr.mxu0 0.0
      %837 = vmatpush1.msra.mxu0 0.0
      %838 = vmatprep.subr.mxu0 0.0
      %839 = vmatpush1.msra.mxu0 0.0
      %840 = vmatprep.subr.mxu0 0.0
      %841 = vmatpush1.msra.mxu0 0.0
      %842 = vmatprep.subr.mxu0 0.0
      %843 = vmatpush1.msra.mxu0 0.0
      %844 = vmatprep.subr.mxu0 0.0
      %845 = vmatpush1.msra.mxu0 0.0
      %846 = vmatprep.subr.mxu0 0.0
      %847 = vmatpush1.msra.mxu0 0.0
      %848 = vmatprep.mubr.f32.mxu0 0.0
      %849 = vmatmul.mubr.f32.gmra.mrb[0].mxu0 %v657
      %v850 = vpop.f32.mrb[0].mxu0
      %v851 = vadd.f32 0.0, %v850
      %v852 = vpop.f32.mrb[0].mxu0
      %853 = vmatprep.mubr.f32.mxu0 0.0
      %854 = vmatmul.mubr.f32.gmra.mrb[0].mxu0 %v658
      %v855 = vpop.f32.mrb[0].mxu0
      %v856 = vadd.f32 0.0, %v855
      %v857 = vpop.f32.mrb[0].mxu0
      %858 = vdwg.mxu0
      %859 = vmatprep.subr.mxu0 0.0
      %860 = vmatpush1.msra.mxu0 %v774
      %861 = vmatprep.subr.mxu0 0.0
      %862 = vmatpush1.msra.mxu0 %v780
      %863 = vmatprep.subr.mxu0 0.0
      %864 = vmatpush1.msra.mxu0 0.0
      %865 = vmatprep.subr.mxu0 0.0
      %866 = vmatpush1.msra.mxu0 0.0
      %867 = vmatprep.subr.mxu0 0.0
      %868 = vmatpush1.msra.mxu0 0.0
      %869 = vmatprep.subr.mxu0 0.0
      %870 = vmatpush1.msra.mxu0 0.0
      %871 = vmatprep.subr.mxu0 0.0
      %872 = vmatpush1.msra.mxu0 0.0
      %873 = vmatprep.subr.mxu0 0.0
      %874 = vmatpush1.msra.mxu0 0.0
      %875 = vmatprep.subr.mxu0 0.0
      %876 = vmatpush1.msra.mxu0 0.0
      %877 = vmatprep.subr.mxu0 0.0
      %878 = vmatpush1.msra.mxu0 0.0
      %879 = vmatprep.subr.mxu0 0.0
      %880 = vmatpush1.msra.mxu0 0.0
      %881 = vmatprep.subr.mxu0 0.0
      %882 = vmatpush1.msra.mxu0 0.0
      %883 = vmatprep.subr.mxu0 0.0
      %884 = vmatpush1.msra.mxu0 0.0
      %885 = vmatprep.subr.mxu0 0.0
      %886 = vmatpush1.msra.mxu0 0.0
      %887 = vmatprep.subr.mxu0 0.0
      %888 = vmatpush1.msra.mxu0 0.0
      %889 = vmatprep.subr.mxu0 0.0
      %890 = vmatpush1.msra.mxu0 0.0
      %891 = vmatprep.subr.mxu0 0.0
      %892 = vmatpush1.msra.mxu0 0.0
      %893 = vmatprep.subr.mxu0 0.0
      %894 = vmatpush1.msra.mxu0 0.0
      %895 = vmatprep.subr.mxu0 0.0
      %896 = vmatpush1.msra.mxu0 0.0
      %897 = vmatprep.subr.mxu0 0.0
      %898 = vmatpush1.msra.mxu0 0.0
      %899 = vmatprep.subr.mxu0 0.0
      %900 = vmatpush1.msra.mxu0 0.0
      %901 = vmatprep.subr.mxu0 0.0
      %902 = vmatpush1.msra.mxu0 0.0
      %903 = vmatprep.subr.mxu0 0.0
      %904 = vmatpush1.msra.mxu0 0.0
      %905 = vmatprep.subr.mxu0 0.0
      %906 = vmatpush1.msra.mxu0 0.0
      %907 = vmatprep.subr.mxu0 0.0
      %908 = vmatpush1.msra.mxu0 0.0
      %909 = vmatprep.subr.mxu0 0.0
      %910 = vmatpush1.msra.mxu0 0.0
      %911 = vmatprep.subr.mxu0 0.0
      %912 = vmatpush1.msra.mxu0 0.0
      %913 = vmatprep.subr.mxu0 0.0
      %914 = vmatpush1.msra.mxu0 0.0
      %915 = vmatprep.subr.mxu0 0.0
      %916 = vmatpush1.msra.mxu0 0.0
      %917 = vmatprep.subr.mxu0 0.0
      %918 = vmatpush1.msra.mxu0 0.0
      %919 = vmatprep.subr.mxu0 0.0
      %920 = vmatpush1.msra.mxu0 0.0
      %921 = vmatprep.subr.mxu0 0.0
      %922 = vmatpush1.msra.mxu0 0.0
      %923 = vmatprep.mubr.f32.mxu0 0.0
      %924 = vmatmul.mubr.f32.gmra.mrb[0].mxu0 %v485
      %v925 = vpop.f32.mrb[0].mxu0
      %v926 = vadd.f32 %v776, %v925
      %v927 = vpop.f32.mrb[0].mxu0
      %928 = vmatprep.mubr.f32.mxu0 0.0
      %929 = vmatmul.mubr.f32.gmra.mrb[0].mxu0 %v488
      %v930 = vpop.f32.mrb[0].mxu0
      %v931 = vadd.f32 %v782, %v930
      %v932 = vpop.f32.mrb[0].mxu0
      %933 = vdwg.mxu0
      %934 = vmatprep.subr.mxu0 0.0
      %935 = vmatpush1.msra.mxu0 %v851
      %936 = vmatprep.subr.mxu0 0.0
      %937 = vmatpush1.msra.mxu0 %v856
      %938 = vmatprep.subr.mxu0 0.0
      %939 = vmatpush1.msra.mxu0 0.0
      %940 = vmatprep.subr.mxu0 0.0
      %941 = vmatpush1.msra.mxu0 0.0
      %942 = vmatprep.subr.mxu0 0.0
      %943 = vmatpush1.msra.mxu0 0.0
      %944 = vmatprep.subr.mxu0 0.0
      %945 = vmatpush1.msra.mxu0 0.0
      %946 = vmatprep.subr.mxu0 0.0
      %947 = vmatpush1.msra.mxu0 0.0
      %948 = vmatprep.subr.mxu0 0.0
      %949 = vmatpush1.msra.mxu0 0.0
      %950 = vmatprep.subr.mxu0 0.0
      %951 = vmatpush1.msra.mxu0 0.0
      %952 = vmatprep.subr.mxu0 0.0
      %953 = vmatpush1.msra.mxu0 0.0
      %954 = vmatprep.subr.mxu0 0.0
      %955 = vmatpush1.msra.mxu0 0.0
      %956 = vmatprep.subr.mxu0 0.0
      %957 = vmatpush1.msra.mxu0 0.0
      %958 = vmatprep.subr.mxu0 0.0
      %959 = vmatpush1.msra.mxu0 0.0
      %960 = vmatprep.subr.mxu0 0.0
      %961 = vmatpush1.msra.mxu0 0.0
      %962 = vmatprep.subr.mxu0 0.0
      %963 = vmatpush1.msra.mxu0 0.0
      %964 = vmatprep.subr.mxu0 0.0
      %965 = vmatpush1.msra.mxu0 0.0
      %966 = vmatprep.subr.mxu0 0.0
      %967 = vmatpush1.msra.mxu0 0.0
      %968 = vmatprep.subr.mxu0 0.0
      %969 = vmatpush1.msra.mxu0 0.0
      %970 = vmatprep.subr.mxu0 0.0
      %971 = vmatpush1.msra.mxu0 0.0
      %972 = vmatprep.subr.mxu0 0.0
      %973 = vmatpush1.msra.mxu0 0.0
      %974 = vmatprep.subr.mxu0 0.0
      %975 = vmatpush1.msra.mxu0 0.0
      %976 = vmatprep.subr.mxu0 0.0
      %977 = vmatpush1.msra.mxu0 0.0
      %978 = vmatprep.subr.mxu0 0.0
      %979 = vmatpush1.msra.mxu0 0.0
      %980 = vmatprep.subr.mxu0 0.0
      %981 = vmatpush1.msra.mxu0 0.0
      %982 = vmatprep.subr.mxu0 0.0
      %983 = vmatpush1.msra.mxu0 0.0
      %984 = vmatprep.subr.mxu0 0.0
      %985 = vmatpush1.msra.mxu0 0.0
      %986 = vmatprep.subr.mxu0 0.0
      %987 = vmatpush1.msra.mxu0 0.0
      %988 = vmatprep.subr.mxu0 0.0
      %989 = vmatpush1.msra.mxu0 0.0
      %990 = vmatprep.subr.mxu0 0.0
      %991 = vmatpush1.msra.mxu0 0.0
      %992 = vmatprep.subr.mxu0 0.0
      %993 = vmatpush1.msra.mxu0 0.0
      %994 = vmatprep.subr.mxu0 0.0
      %995 = vmatpush1.msra.mxu0 0.0
      %996 = vmatprep.subr.mxu0 0.0
      %997 = vmatpush1.msra.mxu0 0.0
      %998 = vmatprep.mubr.f32.mxu0 0.0
      %999 = vmatmul.mubr.f32.gmra.mrb[0].mxu0 %v566
      %v1000 = vpop.f32.mrb[0].mxu0
      %v1001 = vadd.f32 0.0, %v1000
      %v1002 = vpop.f32.mrb[0].mxu0
      %1003 = vmatprep.mubr.f32.mxu0 0.0
      %1004 = vmatmul.mubr.f32.gmra.mrb[0].mxu0 %v569
      %v1005 = vpop.f32.mrb[0].mxu0
      %v1006 = vadd.f32 0.0, %v1005
      %v1007 = vpop.f32.mrb[0].mxu0
      %1008 = vdwg.mxu0
      %v1009 = vadd.f32 %v926, %v1001
      %v1010 = vadd.f32 %v931, %v1006
      %v1011 = vld [vmem:[%s4] sm:$0x1]
      %v1013 = vlaneseq
      %v1014 = vshrl.u32 %v1013, 7
      %v1015 = vsub.s32 0, %v1014
      %v1016 = vrot.slane %v1011, %v1015
      %v1018 = vadd.f32 %v1009, %v1016
      %v1019 = vadd.f32 %v1010, %v1016
      %v1020 = vadd.f32 %v1018, %v228
      %v1021 = vadd.f32 %v1019, %v229
      %1022 = vst [vmem:[%s226] sm:$0xff] %v1020
      %1023 = vst [vmem:[%s226 + $0x8] sm:$0xff] %v1021
      %s1024 = smul.u32 2, %s16
      %p1025 = scmp.lt.s32.totalorder %s1024, 3
      %s1026 = scalar_select %p1025, %s1024, 3
      %s1027 = smul.addr %s1026, 8
      %s1028 = scalar_lea.vmem %s5, %s1027
      // Predicated region
      $region41: #{resblock_forward.1} parent=39 // pred_check
        %p1029 = pneg %p144
      $region42: #{resblock_forward.1} parent=39 // pred_check_branch
        %1031 = sbr.rel (%p1029) target = $region44
      $region43: #{resblock_forward.1} parent=39 // pred_region
        %s1032 = smul.u32 2, %s16
      $region44: #{resblock_forward.1} parent=39 // pred_fallthru
        _
    $region40: #{resblock_forward.1} parent=5 // pred_fallthru
      _
    %p1033 = scmp.le.s32.totalorder 2, %s11
    // Predicated region
    $region45: #{resblock_forward.1} parent=5 // pred_check
      %p1034 = pneg %p1033
    $region46: #{resblock_forward.1} parent=5 // pred_check_branch
      %1036 = sbr.rel (%p1034) target = $region48
    $region47: #{resblock_forward.1} parent=5 // pred_region
      %s1037 = ssub.s32 %s11, 2
      // Predicated region
      $region49: #{resblock_forward.1} parent=47 // pred_check
        %p1038 = pneg %p150
      $region50: #{resblock_forward.1} parent=47 // pred_check_branch
        %1040 = sbr.rel (%p1038) target = $region52
      $region51: #{resblock_forward.1} parent=47 // pred_region
        %s1041 = smul.u32 2, %s17
        %p1042 = scmp.lt.s32.totalorder %s1041, 3
        %s1043 = scalar_select %p1042, %s1041, 3
        %s1044 = smul.addr %s1043, 8
        %s1045 = scalar_lea.vmem %s5, %s1044
      $region52: #{resblock_forward.1} parent=47 // pred_fallthru
        _
    $region48: #{resblock_forward.1} parent=5 // pred_fallthru
      _
  $region6: #{resblock_forward.1} parent=0 // loop_footer
    %s15 = sadd.s32 1, %s11
  $region7: #{resblock_forward.1} parent=0 // loop_footer_branch
    %10 = sbr.rel target = $region3
  $region8: #{resblock_forward.1} parent=0 // loop_exit
    _

</llo_original>
